<compile_context>
chip_gen: v7x
topology: tpu7x:2x2x1
jax: 0.10.0
libtpu: 0.0.40
codegen_flags: <defaults>
</compile_context>

<pallas_src>
import functools

import jax
import jax.numpy as jnp
from jax.experimental import pallas as pl
from jax.experimental.pallas import tpu as pltpu


def _focal_loss_kernel(x_ref, t_ref, o_ref, acc_ref, *, gamma, alpha, hw,
                       block_rows, needs_mask):
    # x_ref : (1, C, TR, 128)  logits tile (pixels dense on sublanes x lanes)
    # t_ref : (1, TR, 128)     int8/int32 class indices
    # o_ref : (1, 1, 1, 1)     f32 per-(batch, p-split) partial sum
    # acc_ref:(TR, 128)        f32 resident accumulator (VMEM scratch)
    p = pl.program_id(1)
    j = pl.program_id(2)
    n_p = pl.num_programs(1)
    n_j = pl.num_programs(2)
    c = x_ref.shape[1]

    @pl.when(j == 0)
    def _():
        acc_ref[...] = jnp.zeros_like(acc_ref)

    t = t_ref[0].astype(jnp.int32)                        # (TR, 128)

    # Pass 1: per-pixel max over classes (dense (TR,128) VPU maxes).
    m = x_ref[0, 0].astype(jnp.float32)
    for k in range(1, c):
        m = jnp.maximum(m, x_ref[0, k].astype(jnp.float32))

    # Pass 2: exp-sum + target gather + alpha gather folded into one C loop.
    sum_ez = jnp.zeros_like(m)
    z_t = jnp.zeros_like(m)
    at = jnp.full_like(m, jnp.float32(alpha[0])) if alpha is not None else None
    for k in range(c):
        zk = x_ref[0, k].astype(jnp.float32) - m
        sum_ez = sum_ez + jnp.exp(zk)                     # EUP
        sel = t == k
        z_t = jnp.where(sel, zk, z_t)
        if alpha is not None and 0 < k < len(alpha):
            # NOTE: target indices >= len(alpha) silently keep alpha[0]
            # (PyTorch gather would raise) -- fine for valid inputs.
            at = jnp.where(sel, jnp.float32(alpha[k]), at)

    logpt = z_t - jnp.log(sum_ez)                         # (TR, 128)
    pt = jnp.exp(logpt)                                   # one EUP op (as in ref)
    logpt_w = logpt * at if alpha is not None else logpt

    one_minus_pt = 1.0 - pt
    if float(gamma) == int(gamma) and int(gamma) >= 0:
        g_int = int(gamma)
        if g_int == 0:
            loss = -1.0 * logpt_w
        else:
            focal = one_minus_pt
            for _ in range(g_int - 1):                    # gamma=2 -> 1 extra mul
                focal = focal * one_minus_pt
            loss = -1.0 * focal * logpt_w
    else:
        loss = -1.0 * jnp.power(one_minus_pt, gamma) * logpt_w

    if needs_mask:
        # Only the globally-last tile can contain padded / out-of-range pixels.
        is_last_tile = jnp.logical_and(p == n_p - 1, j == n_j - 1)

        @pl.when(jnp.logical_not(is_last_tile))
        def _():
            acc_ref[...] += loss

        @pl.when(is_last_tile)
        def _():
            g = p * n_j + j                               # global tile index
            row = jax.lax.broadcasted_iota(jnp.int32, loss.shape, 0)
            lane = jax.lax.broadcasted_iota(jnp.int32, loss.shape, 1)
            gidx = (g * block_rows + row) * 128 + lane
            acc_ref[...] += jnp.where(gidx < hw, loss, 0.0)
    else:
        acc_ref[...] += loss

    @pl.when(j == n_j - 1)
    def _():
        o_ref[0, 0] = jnp.sum(acc_ref[...], axis=(0, 1), keepdims=True)


def focal_loss(x, target, gamma=2.0, alpha=0.25, size_average=True):
    """Pallas equivalent of FocalLoss.forward(input, target)."""
    # alpha handling mirrors the PyTorch __init__ (static Python values).
    if alpha is None:
        alpha_t = None
    elif isinstance(alpha, (float, int)) and not isinstance(alpha, bool):
        alpha_t = (float(alpha), 1.0 - float(alpha))
    else:
        alpha_t = tuple(float(a) for a in alpha)

    # Consume the native (N, C, H*W) layout (loss is permutation-invariant,
    # so flattening order does not matter).
    if x.ndim > 2:
        n, c = int(x.shape[0]), int(x.shape[1])
        hw = 1
        for d in x.shape[2:]:
            hw *= int(d)
        x2 = x.reshape(n, c, hw)
        t2 = target.reshape(n, hw)
    else:
        # 2-D (M, C): transpose once to get the lane-dense (1, C, M) layout.
        m_rows, c = int(x.shape[0]), int(x.shape[1])
        n, hw = 1, m_rows
        x2 = jnp.transpose(x, (1, 0)).reshape(1, c, hw)
        t2 = target.reshape(1, hw)

    # Pad the pixel axis to a multiple of 128 (no-op for typical sizes).
    hw_pad = ((hw + 127) // 128) * 128
    if hw_pad != hw:
        x2 = jnp.pad(x2, ((0, 0), (0, 0), (0, hw_pad - hw)))
        t2 = jnp.pad(t2, ((0, 0), (0, hw_pad - hw)))
    hw128 = hw_pad // 128

    itemsize = jnp.dtype(x2.dtype).itemsize
    if itemsize >= 4:
        row_align = 8
    elif itemsize == 2:
        row_align = 16
    else:
        row_align = 32

    # Tile rows: aim for ~2 MiB of logits per block (amortizes per-step cost).
    target_block_bytes = 2 * 1024 * 1024
    tr_raw = max(1, target_block_bytes // (c * 128 * itemsize))
    tr_raw = min(tr_raw, 2048)
    if tr_raw >= hw128 or hw128 <= row_align:
        tr = hw128                                   # full dim -> always legal
    else:
        tr = max(row_align, (min(tr_raw, hw128) // row_align) * row_align)

    num_tiles = pl.cdiv(hw128, tr)

    # int8 targets when C fits and the tile obeys the int8 (32,128) rule.
    tdtype = jnp.int8 if (c <= 127 and tr % 32 == 0) else jnp.int32

    x3 = x2.reshape(n, c, hw128, 128)
    t3 = t2.reshape(n, hw128, 128).astype(tdtype)

    # Split pixel tiles into a second parallel axis (v7x: keeps both TCs busy).
    p_split = 1
    for cand in (8, 4, 2):
        if num_tiles % cand == 0:
            p_split = cand
            break
    t_per_p = num_tiles // p_split

    needs_mask = hw != num_tiles * tr * 128

    # VMEM budget from actual block sizes (2x pipeline buffers + acc + temps).
    t_item = jnp.dtype(tdtype).itemsize
    x_block = c * tr * 128 * itemsize
    t_block = tr * 128 * t_item
    slab = tr * 128 * 4
    vmem_limit = int(min(max(2 * (x_block + t_block) + 13 * slab + (2 << 20),
                             16 << 20), 48 << 20))

    elems = n * hw
    cost = pl.CostEstimate(
        flops=(8 * c + 16) * elems,
        transcendentals=(c + 3) * elems,
        bytes_accessed=int(x3.size) * itemsize + int(t3.size) * t_item
        + n * p_split * 4,
    )

    kernel = functools.partial(
        _focal_loss_kernel,
        gamma=float(gamma),
        alpha=alpha_t,
        hw=hw,
        block_rows=tr,
        needs_mask=needs_mask,
    )

    partials = pl.pallas_call(
        kernel,
        out_shape=jax.ShapeDtypeStruct((n, p_split, 1, 1), jnp.float32),
        grid_spec=pltpu.PrefetchScalarGridSpec(
            num_scalar_prefetch=0,
            grid=(n, p_split, t_per_p),
            in_specs=[
                pl.BlockSpec((1, c, tr, 128),
                             lambda i, p, j: (i, 0, p * t_per_p + j, 0)),
                pl.BlockSpec((1, tr, 128),
                             lambda i, p, j: (i, p * t_per_p + j, 0)),
            ],
            out_specs=pl.BlockSpec((1, 1, 1, 1), lambda i, p, j: (i, p, 0, 0)),
            scratch_shapes=[pltpu.VMEM((tr, 128), jnp.float32)],
        ),
        compiler_params=pltpu.CompilerParams(
            dimension_semantics=("parallel", "parallel", "arbitrary"),
            vmem_limit_bytes=vmem_limit,
        ),
        cost_estimate=cost,
    )(x3, t3)

    total = jnp.sum(partials)
    if size_average:
        return total / jnp.float32(n * hw)
    return total


def _focal_loss_ref(x, target, gamma=2.0, alpha=0.25, size_average=True):
    """Pure-JAX reference mirroring the PyTorch forward."""
    if alpha is None:
        alpha_arr = None
    elif isinstance(alpha, (float, int)) and not isinstance(alpha, bool):
        alpha_arr = jnp.asarray([alpha, 1.0 - alpha], dtype=jnp.float32)
    else:
        alpha_arr = jnp.asarray(alpha, dtype=jnp.float32)
    if x.ndim > 2:
        n, c = x.shape[0], x.shape[1]
        x = jnp.transpose(x.reshape(n, c, -1), (0, 2, 1)).reshape(-1, c)
    t = target.reshape(-1).astype(jnp.int32)
    lsm = jax.nn.log_softmax(x.astype(jnp.float32), axis=1)
    logpt = jnp.take_along_axis(lsm, t[:, None], axis=1)[:, 0]
    pt = jnp.exp(logpt)
    if alpha_arr is not None:
        logpt = logpt * alpha_arr[t]
    loss = -1.0 * (1.0 - pt) ** gamma * logpt
    return jnp.mean(loss) if size_average else jnp.sum(loss)


if __name__ == "__main__":
    key = jax.random.PRNGKey(0)
    kx, kt = jax.random.split(key)

    # Primary check: binary focal loss on NCHW logits (default alpha=0.25).
    N, C, H, W = 2, 2, 16, 16
    xa = jax.random.normal(kx, (N, C, H, W), dtype=jnp.float32)
    ta = jax.random.randint(kt, (N, H, W), 0, C, dtype=jnp.int32)
    out = jax.block_until_ready(focal_loss(xa, ta, 2.0, 0.25, True))
    ref = _focal_loss_ref(xa, ta, 2.0, 0.25, True)
    assert jnp.allclose(out, ref, rtol=1e-4, atol=1e-6), (out, ref)

    # Multi-class, ragged pixel count (exercises the lane mask), alpha list.
    k1, k2 = jax.random.split(kt)
    xb = jax.random.normal(k1, (1, 3, 10, 13), dtype=jnp.float32)
    tb = jax.random.randint(k2, (1, 10, 13), 0, 3, dtype=jnp.int32)
    out2 = jax.block_until_ready(
        focal_loss(xb, tb, gamma=2.0, alpha=[0.2, 0.3, 0.5],
                   size_average=False))
    ref2 = _focal_loss_ref(xb, tb, 2.0, [0.2, 0.3, 0.5], False)
    assert jnp.allclose(out2, ref2, rtol=1e-4, atol=1e-5), (out2, ref2)

    # 2-D (M, C) path, no alpha, non-integer gamma (power path).
    k3, k4 = jax.random.split(k1)
    xc = jax.random.normal(k3, (100, 4), dtype=jnp.float32)
    tc = jax.random.randint(k4, (100,), 0, 4, dtype=jnp.int32)
    out3 = jax.block_until_ready(
        focal_loss(xc, tc, gamma=1.5, alpha=None, size_average=True))
    ref3 = _focal_loss_ref(xc, tc, 1.5, None, True)
    assert jnp.allclose(out3, ref3, rtol=1e-4, atol=1e-6), (out3, ref3)

    print("KERNEL_OK")
</pallas_src>

<mosaic_0001>
module attributes {stable_mosaic.version = 11 : i64} {
  func.func @_focal_loss_kernel(%arg0: i32, %arg1: i32, %arg2: i32, %arg3: memref<1x2x2x128xf32, #tpu.memory_space<vmem>>, %arg4: memref<1x2x128xi32, #tpu.memory_space<vmem>>, %arg5: memref<1x1x1x1xf32, #tpu.memory_space<vmem>>, %arg6: memref<2x128xf32, #tpu.memory_space<vmem>>) attributes {dimension_semantics = [#tpu.dimension_semantics<parallel>, #tpu.dimension_semantics<parallel>, #tpu.dimension_semantics<arbitrary>], iteration_bounds = array<i64: 2, 1, 1>, scalar_prefetch = 0 : i64, scratch_operands = 1 : i64, tpu.core_type = #tpu.core_type<tc>, window_params = [{transform_indices = @transform_0, window_bounds = array<i64: 1, 2, 2, 128>}, {transform_indices = @transform_1, window_bounds = array<i64: 1, 2, 128>}, {transform_indices = @transform_2, window_bounds = array<i64: 1, 1, 1, 1>}]} {
    %c0_i32 = arith.constant 0 : i32
    %0 = arith.cmpi eq, %arg2, %c0_i32 : i32
    %1 = arith.extui %0 : i1 to i32
    %c0_i32_0 = arith.constant 0 : i32
    %2 = arith.cmpi ne, %1, %c0_i32_0 : i32
    scf.if %2 {
      %cst_30 = arith.constant 0.000000e+00 : f32
      %47 = vector.broadcast %cst_30 : f32 to vector<2x128xf32>
      %c0_31 = arith.constant 0 : index
      %c0_32 = arith.constant 0 : index
      %48 = vector.load %arg6[%c0_31, %c0_32] : memref<2x128xf32, #tpu.memory_space<vmem>>, vector<2x128xf32>
      tpu.vector_store %arg6[%c0_31, %c0_32], %47 {strides = array<i32>} : memref<2x128xf32, #tpu.memory_space<vmem>>, vector<2x128xf32>,
    } else {
    }
    %c0 = arith.constant 0 : index
    %c0_1 = arith.constant 0 : index
    %c0_2 = arith.constant 0 : index
    %3 = vector.load %arg4[%c0, %c0_1, %c0_2] : memref<1x2x128xi32, #tpu.memory_space<vmem>>, vector<1x2x128xi32>
    %4 = vector.shape_cast %3 : vector<1x2x128xi32> to vector<2x128xi32>
    %c0_3 = arith.constant 0 : index
    %c0_4 = arith.constant 0 : index
    %c0_5 = arith.constant 0 : index
    %c0_6 = arith.constant 0 : index
    %5 = vector.load %arg3[%c0_3, %c0_4, %c0_5, %c0_6] : memref<1x2x2x128xf32, #tpu.memory_space<vmem>>, vector<1x1x2x128xf32>
    %6 = vector.shape_cast %5 : vector<1x1x2x128xf32> to vector<2x128xf32>
    %c0_7 = arith.constant 0 : index
    %c1 = arith.constant 1 : index
    %c0_8 = arith.constant 0 : index
    %c0_9 = arith.constant 0 : index
    %7 = vector.load %arg3[%c0_7, %c1, %c0_8, %c0_9] : memref<1x2x2x128xf32, #tpu.memory_space<vmem>>, vector<1x1x2x128xf32>
    %8 = vector.shape_cast %7 : vector<1x1x2x128xf32> to vector<2x128xf32>
    %9 = arith.maximumf %6, %8 : vector<2x128xf32>
    %cst = arith.constant 0.000000e+00 : f32
    %10 = vector.broadcast %cst : f32 to vector<2x128xf32>
    %cst_10 = arith.constant 0.000000e+00 : f32
    %11 = vector.broadcast %cst_10 : f32 to vector<2x128xf32>
    %cst_11 = arith.constant 2.500000e-01 : f32
    %12 = vector.broadcast %cst_11 : f32 to vector<2x128xf32>
    %c0_12 = arith.constant 0 : index
    %c0_13 = arith.constant 0 : index
    %c0_14 = arith.constant 0 : index
    %c0_15 = arith.constant 0 : index
    %13 = vector.load %arg3[%c0_12, %c0_13, %c0_14, %c0_15] : memref<1x2x2x128xf32, #tpu.memory_space<vmem>>, vector<1x1x2x128xf32>
    %14 = vector.shape_cast %13 : vector<1x1x2x128xf32> to vector<2x128xf32>
    %15 = arith.subf %14, %9 : vector<2x128xf32>
    %16 = math.exp %15 : vector<2x128xf32>
    %17 = arith.addf %10, %16 : vector<2x128xf32>
    %c0_i32_16 = arith.constant 0 : i32
    %18 = vector.broadcast %c0_i32_16 : i32 to vector<2x128xi32>
    %19 = arith.cmpi eq, %4, %18 : vector<2x128xi32>
    %20 = arith.select %19, %15, %11 : vector<2x128xi1>, vector<2x128xf32>
    %c0_17 = arith.constant 0 : index
    %c1_18 = arith.constant 1 : index
    %c0_19 = arith.constant 0 : index
    %c0_20 = arith.constant 0 : index
    %21 = vector.load %arg3[%c0_17, %c1_18, %c0_19, %c0_20] : memref<1x2x2x128xf32, #tpu.memory_space<vmem>>, vector<1x1x2x128xf32>
    %22 = vector.shape_cast %21 : vector<1x1x2x128xf32> to vector<2x128xf32>
    %23 = arith.subf %22, %9 : vector<2x128xf32>
    %24 = math.exp %23 : vector<2x128xf32>
    %25 = arith.addf %17, %24 : vector<2x128xf32>
    %c1_i32 = arith.constant 1 : i32
    %26 = vector.broadcast %c1_i32 : i32 to vector<2x128xi32>
    %27 = arith.cmpi eq, %4, %26 : vector<2x128xi32>
    %28 = arith.select %27, %23, %20 : vector<2x128xi1>, vector<2x128xf32>
    %cst_21 = arith.constant 7.500000e-01 : f32
    %29 = vector.broadcast %cst_21 : f32 to vector<2x128xf32>
    %30 = arith.select %27, %29, %12 : vector<2x128xi1>, vector<2x128xf32>
    %31 = math.log %25 : vector<2x128xf32>
    %32 = arith.subf %28, %31 : vector<2x128xf32>
    %33 = math.exp %32 : vector<2x128xf32>
    %34 = arith.mulf %32, %30 : vector<2x128xf32>
    %cst_22 = arith.constant 1.000000e+00 : f32
    %35 = vector.broadcast %cst_22 : f32 to vector<2x128xf32>
    %36 = arith.subf %35, %33 : vector<2x128xf32>
    %37 = arith.mulf %36, %36 : vector<2x128xf32>
    %cst_23 = arith.constant -1.000000e+00 : f32
    %38 = vector.broadcast %cst_23 : f32 to vector<2x128xf32>
    %39 = arith.mulf %38, %37 : vector<2x128xf32>
    %40 = arith.mulf %39, %34 : vector<2x128xf32>
    %c0_24 = arith.constant 0 : index
    %c0_25 = arith.constant 0 : index
    %41 = vector.load %arg6[%c0_24, %c0_25] : memref<2x128xf32, #tpu.memory_space<vmem>>, vector<2x128xf32>
    %42 = arith.addf %41, %40 : vector<2x128xf32>
    %c0_26 = arith.constant 0 : index
    %c0_27 = arith.constant 0 : index
    %43 = vector.load %arg6[%c0_26, %c0_27] : memref<2x128xf32, #tpu.memory_space<vmem>>, vector<2x128xf32>
    tpu.vector_store %arg6[%c0_26, %c0_27], %42 {strides = array<i32>} : memref<2x128xf32, #tpu.memory_space<vmem>>, vector<2x128xf32>,
    %c0_i32_28 = arith.constant 0 : i32
    %44 = arith.cmpi eq, %arg2, %c0_i32_28 : i32
    %45 = arith.extui %44 : i1 to i32
    %c0_i32_29 = arith.constant 0 : i32
    %46 = arith.cmpi ne, %45, %c0_i32_29 : i32
    scf.if %46 {
      %c0_30 = arith.constant 0 : index
      %c0_31 = arith.constant 0 : index
      %47 = vector.load %arg6[%c0_30, %c0_31] : memref<2x128xf32, #tpu.memory_space<vmem>>, vector<2x128xf32>
      %48 = vector.shape_cast %47 : vector<2x128xf32> to vector<1x2x128xf32>
      %cst_32 = arith.constant dense<0.000000e+00> : vector<1xf32>
      %49 = vector.multi_reduction <add>, %48, %cst_32 [1, 2] : vector<1x2x128xf32> to vector<1xf32>
      %50 = vector.shape_cast %49 : vector<1xf32> to vector<1x1x1xf32>
      %51 = vector.extract %50[0, 0, 0] : f32 from vector<1x1x1xf32>
      %52 = vector.broadcast %51 : f32 to vector<1x1xf32>
      %c0_33 = arith.constant 0 : index
      %c0_34 = arith.constant 0 : index
      %c0_35 = arith.constant 0 : index
      %c0_36 = arith.constant 0 : index
      %53 = vector.load %arg5[%c0_33, %c0_34, %c0_35, %c0_36] : memref<1x1x1x1xf32, #tpu.memory_space<vmem>>, vector<1x1x1x1xf32>
      %54 = vector.shape_cast %53 : vector<1x1x1x1xf32> to vector<1x1xf32>
      %55 = vector.shape_cast %52 : vector<1x1xf32> to vector<1x1x1x1xf32>
      tpu.vector_store %arg5[%c0_33, %c0_34, %c0_35, %c0_36], %55 {strides = array<i32>} : memref<1x1x1x1xf32, #tpu.memory_space<vmem>>, vector<1x1x1x1xf32>,
    } else {
    }
    return
  }
  func.func @transform_0(%arg0: i32, %arg1: i32, %arg2: i32) -> (i32, i32, i32, i32) {
    %c1_i32 = arith.constant 1 : i32
    %0 = arith.muli %arg1, %c1_i32 : i32
    %1 = arith.addi %0, %arg2 : i32
    %c0_i32 = arith.constant 0 : i32
    %c0_i32_0 = arith.constant 0 : i32
    %c0_i32_1 = arith.constant 0 : i32
    return %arg0, %c0_i32, %1, %c0_i32_0 : i32, i32, i32, i32
  }
  func.func @transform_1(%arg0: i32, %arg1: i32, %arg2: i32) -> (i32, i32, i32) {
    %c1_i32 = arith.constant 1 : i32
    %0 = arith.muli %arg1, %c1_i32 : i32
    %1 = arith.addi %0, %arg2 : i32
    %c0_i32 = arith.constant 0 : i32
    %c0_i32_0 = arith.constant 0 : i32
    return %arg0, %1, %c0_i32 : i32, i32, i32
  }
  func.func @transform_2(%arg0: i32, %arg1: i32, %arg2: i32) -> (i32, i32, i32, i32) {
    %c0_i32 = arith.constant 0 : i32
    %c0_i32_0 = arith.constant 0 : i32
    %c0_i32_1 = arith.constant 0 : i32
    return %arg0, %arg1, %c0_i32, %c0_i32_0 : i32, i32, i32, i32
  }
}

</mosaic_0001>

<llo_original>
// kernel: tpu_custom_call.1
$region0: #{tpu_custom_call.1}
  #allocation0 [shape = 'u32[]', space=smem, size = 0x4, offset = 0x4, fixed_abs, tag = 'smem constant byte address 0x4 - core index']
  #allocation1 [shape = 'u32[144,128]{1,0:T(1,128)}', space=vmem, size = 0x12000, scoped, tag = 'internal scratch']
  #allocation2 [shape = 'f32[2,128]{1,0:T(2,128)}', space=vmem, size = 0x400, scoped, tag = 'scratch operand']
  %s0 = inlined_call_operand.hbm [shape: f32[2,2,2,128], index: 0, kind: input, shape index: {}]
  %s1 = inlined_call_operand.hbm [shape: s32[2,2,128], index: 1, kind: input, shape index: {}]
  %s2 = inlined_call_operand.vmem [shape: f32[2,1,1,1], index: 2, kind: output, shape index: {}]
  %s3 = sld [smem:[#allocation0]]
  $region57: #{tpu_custom_call.1} parent=0
    _
  %s5 = ssub.s32 1, %s3
  %s6 = scalar_select 0, %s5, %s3
  $region1: #{tpu_custom_call.1} parent=0
    #allocation3 [shape = 'u8[4096]{0}', space=vmem, size = 0x1000, scoped, tag = 'input window, operand 0']
    #allocation4 [shape = 's32[2]{0}', space=sflag, size = 0x8, scoped, tag = 'scoped memory for tpu_custom_call.1']
    #allocation5 [shape = 'u8[2048]{0}', space=vmem, size = 0x800, scoped, tag = 'input window, operand 1']
    #allocation6 [shape = 's32[2]{0}', space=sflag, size = 0x8, scoped, tag = 'scoped memory for tpu_custom_call.1']
    %7 = vsyncpa [#allocation4], 0
    %s8 = scalar_lea.sflag [#allocation4], 1
    %9 = vsyncpa %s8, 0
    %10 = vsyncpa [#allocation6], 0
    %s11 = scalar_lea.sflag [#allocation6], 1
    %12 = vsyncpa %s11, 0
    loop: start=0, step=1, limit=4
    $region2: #{tpu_custom_call.1} parent=1 // loop_pre_header
      _
    $region3: #{tpu_custom_call.1} parent=1 // loop_header
      %s14 = sphi 0, %s18
      %p15 = scmp.ge.s32.totalorder %s14, 4
      %s21 = sphi 0, %s40
      %s22 = sphi 0, %s36
      %s23 = sphi 0, %s32
      %s24 = sphi 0, %s21
      %s25 = sphi 0, %s22
      %s26 = sphi 0, %s23
      %s27 = sphi 0, %s24
      %s28 = sphi 0, %s25
      %s29 = sphi 0, %s26
      %s47 = sphi 0, %s49
      %s50 = sphi 0, %s47
      %s51 = sphi 0, %s50
      %s67 = sphi 0, %s51
      %s77 = sphi 0, %s79
      %s80 = sphi 0, %s77
      %s81 = sphi 0, %s80
      %s97 = sphi 0, %s81
      %s105 = sphi 0, %s107
      %s108 = sphi 0, %s105
      %s109 = sphi 0, %s108
      %s125 = sphi 0, %s109
    $region4: #{tpu_custom_call.1} parent=1 // loop_header_branch
      %17 = sbr.rel (%p15) target = $region8
    $region5: #{tpu_custom_call.1} parent=1 // loop_body
      %s19 = ssub.s32 %s14, 1
      %s20 = ssub.s32 %s14, 2
      %s30 = sadd.s32 1, %s23
      %p31 = scmp.ge.s32.totalorder %s30, 1
      %s32 = scalar_select %p31, 0, %s30
      %s33 = sadd.s32 1, %s22
      %s34 = scalar_select %p31, %s33, %s22
      %p35 = scmp.ge.s32.totalorder %s34, 1
      %s36 = scalar_select %p35, 0, %s34
      %s37 = sadd.s32 1, %s21
      %s38 = scalar_select %p35, %s37, %s21
      %p39 = scmp.ge.s32.totalorder %s38, 2
      %s40 = scalar_select %p39, 0, %s38
      %s41 = sadd.s32 %s22, %s23
      %s42 = sadd.s32 %s36, %s32
      %s43 = ssub.s32 %s21, %s40
      %s44 = ssub.s32 %s41, %s42
      %s45 = sor.u32 %s43, %s44
      %p46 = scmp.eq.s32.totalorder %s45, 0
      %s48 = sadd.s32 %s47, 1
      %s49 = scalar_select %p46, %s47, %s48
      %p52 = pneg %p46
      %p53 = scmp.eq.s32.totalorder %s14, 1
      %p54 = por %p52, %p53
      %p55 = scmp.ne.s32.totalorder %s47, %s50
      %p56 = scmp.eq.s32.totalorder %s14, 0
      %p57 = por %p55, %p56
      %p58 = scmp.ne.s32.totalorder %s47, %s50
      %p59 = scmp.eq.s32.totalorder %s19, 1
      %p60 = por %p58, %p59
      %p61 = scmp.ne.s32.totalorder %s50, %s51
      %p62 = scmp.eq.s32.totalorder %s19, 0
      %p63 = por %p61, %p62
      %p64 = scmp.ne.s32.totalorder %s50, %s51
      %p65 = scmp.eq.s32.totalorder %s20, 1
      %p66 = por %p64, %p65
      %p68 = scmp.ne.s32.totalorder %s51, %s67
      %p69 = scmp.eq.s32.totalorder %s20, 0
      %p70 = por %p68, %p69
      %s71 = sadd.s32 %s22, %s23
      %s72 = sadd.s32 %s36, %s32
      %s73 = ssub.s32 %s21, %s40
      %s74 = ssub.s32 %s71, %s72
      %s75 = sor.u32 %s73, %s74
      %p76 = scmp.eq.s32.totalorder %s75, 0
      %s78 = sadd.s32 %s77, 1
      %s79 = scalar_select %p76, %s77, %s78
      %p82 = pneg %p76
      %p83 = scmp.eq.s32.totalorder %s14, 1
      %p84 = por %p82, %p83
      %p85 = scmp.ne.s32.totalorder %s77, %s80
      %p86 = scmp.eq.s32.totalorder %s14, 0
      %p87 = por %p85, %p86
      %p88 = scmp.ne.s32.totalorder %s77, %s80
      %p89 = scmp.eq.s32.totalorder %s19, 1
      %p90 = por %p88, %p89
      %p91 = scmp.ne.s32.totalorder %s80, %s81
      %p92 = scmp.eq.s32.totalorder %s19, 0
      %p93 = por %p91, %p92
      %p94 = scmp.ne.s32.totalorder %s80, %s81
      %p95 = scmp.eq.s32.totalorder %s20, 1
      %p96 = por %p94, %p95
      %p98 = scmp.ne.s32.totalorder %s81, %s97
      %p99 = scmp.eq.s32.totalorder %s20, 0
      %p100 = por %p98, %p99
      %s101 = ssub.s32 %s21, %s40
      %s102 = ssub.s32 %s22, %s36
      %s103 = sor.u32 %s101, %s102
      %p104 = scmp.eq.s32.totalorder %s103, 0
      %s106 = sadd.s32 %s105, 1
      %s107 = scalar_select %p104, %s105, %s106
      %p110 = pneg %p104
      %p111 = scmp.eq.s32.totalorder %s14, 1
      %p112 = por %p110, %p111
      %p113 = scmp.ne.s32.totalorder %s105, %s108
      %p114 = scmp.eq.s32.totalorder %s14, 0
      %p115 = por %p113, %p114
      %p116 = scmp.ne.s32.totalorder %s105, %s108
      %p117 = scmp.eq.s32.totalorder %s19, 1
      %p118 = por %p116, %p117
      %p119 = scmp.ne.s32.totalorder %s108, %s109
      %p120 = scmp.eq.s32.totalorder %s19, 0
      %p121 = por %p119, %p120
      %p122 = scmp.ne.s32.totalorder %s108, %s109
      %p123 = scmp.eq.s32.totalorder %s20, 1
      %p124 = por %p122, %p123
      %p126 = scmp.ne.s32.totalorder %s109, %s125
      %p127 = scmp.eq.s32.totalorder %s20, 0
      %p128 = por %p126, %p127
      %p129 = scmp.le.s32.totalorder 1, %s14
      %p130 = scmp.lt.s32.totalorder %s14, 3
      %p131 = pnand %p129, %p130
      %p132 = pneg %p131
      // Predicated region
      $region9: #{tpu_custom_call.1} parent=5 // pred_check
        _
      $region10: #{tpu_custom_call.1} parent=5 // pred_check_branch
        %134 = sbr.rel (%p131) target = $region12
      $region11: #{tpu_custom_call.1} parent=5 // pred_region
        %s135 = ssub.s32 %s14, 1
      $region12: #{tpu_custom_call.1} parent=5 // pred_fallthru
        _
      %p136 = scmp.lt.s32.totalorder %s14, 2
      // Predicated region
      $region13: #{tpu_custom_call.1} parent=5 // pred_check
        %p137 = pneg %p136
      $region14: #{tpu_custom_call.1} parent=5 // pred_check_branch
        %139 = sbr.rel (%p137) target = $region16
      $region15: #{tpu_custom_call.1} parent=5 // pred_region
        // Predicated region
        $region17: #{tpu_custom_call.1} parent=15 // pred_check
          %p140 = pneg %p57
        $region18: #{tpu_custom_call.1} parent=15 // pred_check_branch
          %142 = sbr.rel (%p140) target = $region20
        $region19: #{tpu_custom_call.1} parent=15 // pred_region
          %s143 = sand.u32 %s47, 1
          %s144 = scalar_lea.sflag [#allocation4], %s143
          %s145 = sand.u32 %s47, 1
          %s146 = smul.addr %s145, 4
          %s147 = scalar_lea.vmem [#allocation3], %s146
          %s148 = sadd.s32 %s22, %s23
          %s150 = ssub.s32 64, 64
          %151 = vsyncadd %s144, %s150
          %s152 = smul.addr %s21, 2
          %s153 = sadd.s32 %s148, %s152
          %s154 = smul.addr %s153, 32
          %s155 = scalar_lea.hbm %s0, %s154
          %s156 = sshll.u32 %s147, 4
          %s157 = int_to_ptr.vmem [resolvable:$true] %s156
          %162 = dma.hbm_to_vmem [thread:$0]  %s155, 64, %s157, %s144, 32, 32, 2
        $region20: #{tpu_custom_call.1} parent=15 // pred_fallthru
          _
        // Predicated region
        $region21: #{tpu_custom_call.1} parent=15 // pred_check
          %p163 = pneg %p87
        $region22: #{tpu_custom_call.1} parent=15 // pred_check_branch
          %165 = sbr.rel (%p163) target = $region24
        $region23: #{tpu_custom_call.1} parent=15 // pred_region
          %s166 = sand.u32 %s77, 1
          %s167 = scalar_lea.sflag [#allocation6], %s166
          %s168 = sand.u32 %s77, 1
          %s169 = smul.addr %s168, 2
          %s170 = scalar_lea.vmem [#allocation5], %s169
          %s171 = sadd.s32 %s22, %s23
          %s173 = ssub.s32 32, 32
          %174 = vsyncadd %s167, %s173
          %s175 = sadd.s32 %s171, %s21
          %s176 = smul.addr %s175, 32
          %s177 = scalar_lea.hbm %s1, %s176
          %s179 = sshll.u32 %s170, 4
          %s180 = int_to_ptr.vmem [resolvable:$true] %s179
          %182 = dma.hbm_to_vmem [thread:$0]  %s177, 32, %s180, %s167
        $region24: #{tpu_custom_call.1} parent=15 // pred_fallthru
          _
      $region16: #{tpu_custom_call.1} parent=5 // pred_fallthru
        _
      %p183 = scmp.le.s32.totalorder 1, %s14
      %p184 = scmp.lt.s32.totalorder %s14, 3
      %p185 = pnand %p183, %p184
      %p186 = pneg %p185
      // Predicated region
      $region25: #{tpu_custom_call.1} parent=5 // pred_check
        _
      $region26: #{tpu_custom_call.1} parent=5 // pred_check_branch
        %188 = sbr.rel (%p185) target = $region28
      $region27: #{tpu_custom_call.1} parent=5 // pred_region
        %s189 = ssub.s32 %s14, 1
        %s190 = sand.u32 %s50, 1
        %s191 = scalar_lea.sflag [#allocation4], %s190
        %s192 = sand.u32 %s50, 1
        %s193 = smul.addr %s192, 4
        %s194 = scalar_lea.vmem [#allocation3], %s193
        // Predicated region
        $region29: #{tpu_custom_call.1} parent=27 // pred_check
          %p195 = pneg %p63
        $region30: #{tpu_custom_call.1} parent=27 // pred_check_branch
          %197 = sbr.rel (%p195) target = $region32
        $region31: #{tpu_custom_call.1} parent=27 // pred_region
          %198 = dma.done %s191, 64
        $region32: #{tpu_custom_call.1} parent=27 // pred_fallthru
          _
        %s199 = sand.u32 %s80, 1
        %s200 = scalar_lea.sflag [#allocation6], %s199
        %s201 = sand.u32 %s80, 1
        %s202 = smul.addr %s201, 2
        %s203 = scalar_lea.vmem [#allocation5], %s202
        // Predicated region
        $region33: #{tpu_custom_call.1} parent=27 // pred_check
          %p204 = pneg %p93
        $region34: #{tpu_custom_call.1} parent=27 // pred_check_branch
          %206 = sbr.rel (%p204) target = $region36
        $region35: #{tpu_custom_call.1} parent=27 // pred_region
          %207 = dma.done %s200, 32
        $region36: #{tpu_custom_call.1} parent=27 // pred_fallthru
          _
        %s208 = sand.u32 %s50, 1
        %s209 = scalar_lea.sflag [#allocation4], %s208
        %s210 = sand.u32 %s50, 1
        %s211 = smul.addr %s210, 4
        %s212 = scalar_lea.vmem [#allocation3], %s211
        %p213 = pneg %p63
        %p214 = pneg %p60
        %s215 = sand.u32 %s80, 1
        %s216 = scalar_lea.sflag [#allocation6], %s215
        %s217 = sand.u32 %s80, 1
        %s218 = smul.addr %s217, 2
        %s219 = scalar_lea.vmem [#allocation5], %s218
        %p220 = pneg %p93
        %p221 = pneg %p90
        %p222 = pneg %p121
        %p223 = pneg %p118
        %p224 = scmp.lt.s32.totalorder %s24, 1
        %s225 = scalar_select %p224, %s24, 1
        %p226 = scmp.lt.s32.totalorder %s25, 0
        %s227 = scalar_select %p226, %s25, 0
        %s228 = sadd.s32 %s227, %s225
        %s229 = scalar_lea.vmem %s2, %s228
        %s230 = sadd.s32 %s25, %s26
        %s231 = sadd.s32 %s25, %s26
        %p232 = scmp.lt.s32.totalorder %s24, 1
        %s233 = scalar_select %p232, %s24, 1
        %p234 = scmp.lt.s32.totalorder %s25, 0
        %s235 = scalar_select %p234, %s25, 0
        %s236 = sadd.s32 %s235, %s233
        %s237 = scalar_lea.vmem %s2, %s236
        %p238 = scmp.eq.s32.totalorder %s26, 0
        // Predicated region
        $region37: #{tpu_custom_call.1} parent=27 // pred_check
          %p239 = pneg %p238
        $region38: #{tpu_custom_call.1} parent=27 // pred_check_branch
          %241 = sbr.rel (%p239) target = $region40
        $region39: #{tpu_custom_call.1} parent=27 // pred_region
          %242 = vst [vmem:[#allocation2] sm:$0x3] 0.0
        $region40: #{tpu_custom_call.1} parent=27 // pred_fallthru
          _
        %v243 = vld [vmem:[%s203] sm:$0x3]
        %v244 = vld [vmem:[%s194] sm:$0x3]
        %s245 = scalar_lea.vmem %s194, 2 [#allocation3]
        %v246 = vld [vmem:[%s245] sm:$0x3]
        %v247 = vmax.f32 %v244, %v246
        %v248 = vsub.f32 %v244, %v247
        %v249 = vmul.f32 %v248, 1.442695
        %v250 = vpow.pop %v249
        %v251 = vadd.f32 %v250, 0.0
        %vm252 = vcmp.eq.s32.totalorder %v243, 0
        %v253 = vsel %vm252, %v248, 0.0
        %v254 = vsub.f32 %v246, %v247
        %v255 = vmul.f32 %v254, 1.442695
        %v256 = vpow.pop %v255
        %v257 = vadd.f32 %v251, %v256
        %vm258 = vcmp.eq.s32.totalorder %v243, 1
        %v259 = vsel %vm258, %v254, %v253
        %v260 = vsel %vm258, 0.75, 0.25
        %v261 = vlog2.pop %v257
        %v262 = vmul.f32 %v261, 0.6931472
        %v263 = vsub.f32 %v259, %v262
        %v264 = vmul.f32 %v263, 1.442695
        %v265 = vpow.pop %v264
        %v266 = vmul.f32 %v263, %v260
        %v267 = vsub.f32 1.0, %v265
        %v268 = vmul.f32 %v267, %v267
        %v269 = vmul.f32 %v268, -1.0
        %v270 = vmul.f32 %v269, %v266
        %v271 = vld [vmem:[#allocation2] sm:$0x3]
        %v272 = vadd.f32 %v271, %v270
        %273 = vst [vmem:[#allocation2] sm:$0x3] %v272
        // Predicated region
        $region41: #{tpu_custom_call.1} parent=27 // pred_check
          %p274 = pneg %p238
        $region42: #{tpu_custom_call.1} parent=27 // pred_check_branch
          %276 = sbr.rel (%p274) target = $region44
        $region43: #{tpu_custom_call.1} parent=27 // pred_region
          %v277 = vld [vmem:[#allocation2] sm:$0x3]
          %vm278 = vcmask 1041408
          %v279 = vsel %vm278, %v277, 0.0
          %280 = vadd.xlane.f32.xlu0 %v279
          %v281 = vpop.xlane.xlu0 %280
          %v282 = vrot.slane %v281, 4
          %v283 = vadd.f32 %v281, %v282
          %v284 = vrot.slane %v283, 2
          %v285 = vadd.f32 %v283, %v284
          %v286 = vrot.slane %v285, 1
          %v287 = vadd.f32 %v285, %v286
          %s288 = vtos %v287
          %v289 = vstv %s288
          %vm290 = vcmask 0
          %291 = vst.msk [vmem:[%s237] sm:$0x1] %vm290, %v289
        $region44: #{tpu_custom_call.1} parent=27 // pred_fallthru
          _
        %p292 = scmp.lt.s32.totalorder %s24, 1
        %s293 = scalar_select %p292, %s24, 1
        %p294 = scmp.lt.s32.totalorder %s25, 0
        %s295 = scalar_select %p294, %s25, 0
        %s296 = sadd.s32 %s295, %s293
        %s297 = scalar_lea.vmem %s2, %s296
        // Predicated region
        $region45: #{tpu_custom_call.1} parent=27 // pred_check
          %p298 = pneg %p118
        $region46: #{tpu_custom_call.1} parent=27 // pred_check_branch
          %300 = sbr.rel (%p298) target = $region48
        $region47: #{tpu_custom_call.1} parent=27 // pred_region
          _
        $region48: #{tpu_custom_call.1} parent=27 // pred_fallthru
          _
      $region28: #{tpu_custom_call.1} parent=5 // pred_fallthru
        _
      %p301 = scmp.le.s32.totalorder 2, %s14
      // Predicated region
      $region49: #{tpu_custom_call.1} parent=5 // pred_check
        %p302 = pneg %p301
      $region50: #{tpu_custom_call.1} parent=5 // pred_check_branch
        %304 = sbr.rel (%p302) target = $region52
      $region51: #{tpu_custom_call.1} parent=5 // pred_region
        %s305 = ssub.s32 %s14, 2
        // Predicated region
        $region53: #{tpu_custom_call.1} parent=51 // pred_check
          %p306 = pneg %p124
        $region54: #{tpu_custom_call.1} parent=51 // pred_check_branch
          %308 = sbr.rel (%p306) target = $region56
        $region55: #{tpu_custom_call.1} parent=51 // pred_region
          %p309 = scmp.lt.s32.totalorder %s27, 1
          %s310 = scalar_select %p309, %s27, 1
          %p311 = scmp.lt.s32.totalorder %s28, 0
          %s312 = scalar_select %p311, %s28, 0
          %s313 = sadd.s32 %s312, %s310
          %s314 = scalar_lea.vmem %s2, %s313
        $region56: #{tpu_custom_call.1} parent=51 // pred_fallthru
          _
      $region52: #{tpu_custom_call.1} parent=5 // pred_fallthru
        _
    $region6: #{tpu_custom_call.1} parent=1 // loop_footer
      %s18 = sadd.s32 1, %s14
    $region7: #{tpu_custom_call.1} parent=1 // loop_footer_branch
      %13 = sbr.rel target = $region3
    $region8: #{tpu_custom_call.1} parent=1 // loop_exit
      _
    %315 = vsyncpa [#allocation4], 1
    %s316 = scalar_lea.sflag [#allocation4], 1
    %317 = vsyncpa %s316, 1
    %318 = vsyncpa [#allocation6], 1
    %s319 = scalar_lea.sflag [#allocation6], 1
    %320 = vsyncpa %s319, 1

</llo_original>
